<compile_context>
chip_gen: v5e
topology: v5e:2x2
jax: 0.10.0
libtpu: 0.0.40
codegen_flags: <defaults>
</compile_context>

<pallas_src>
import math
import functools

import jax
import jax.numpy as jnp
from jax.experimental import pallas as pl
from jax.experimental.pallas import tpu as pltpu


# ----------------------------------------------------------------------------
# Parameter / buffer setup (glue, plain JAX)
# ----------------------------------------------------------------------------
def make_positional_encoding(d_model: int, max_len: int) -> jnp.ndarray:
    """Build the sinusoidal pe buffer, shape (max_len, d_model), float32."""
    position = jnp.arange(max_len, dtype=jnp.float32)[:, None]            # (max_len, 1)
    div_term = jnp.exp(
        jnp.arange(0, d_model, 2, dtype=jnp.float32)
        * (-math.log(10000.0) / d_model)
    )                                                                      # (d_model/2,)
    angles = position * div_term                                           # (max_len, d_model/2)
    pe = jnp.zeros((max_len, d_model), dtype=jnp.float32)
    pe = pe.at[:, 0::2].set(jnp.sin(angles))
    pe = pe.at[:, 1::2].set(jnp.cos(angles))
    # TODO(synk): plt.imshow/plt.show in __init__ is a debug visualization with
    # no kernel equivalent; intentionally skipped.
    return pe


# ----------------------------------------------------------------------------
# Tiling heuristic for the flattened (B, S*D) layout
# ----------------------------------------------------------------------------
def _pick_tiles(batch: int, n_cols: int, *, bytes_per_el: int = 4,
                vmem_budget: int = 8 * 1024 * 1024):
    """Pick (row_tile, col_tile).

    Working set per grid step ~= double-buffered x + out blocks of (tb, tc)
    plus double-buffered pe blocks of (1, tc): (4*tb + 2) * tc * bytes.
    Keep it under ~8 MiB so the default scoped-VMEM limit (16 MiB on v5e,
    32 MiB on v6e/v7x) always fits with full double buffering.
    """
    if batch <= 8:
        tb = batch                       # block == full dim is always legal
    elif batch % 8 == 0:
        tb = 8                           # pack 8 batches per block (sublanes)
    else:
        tb = batch
    max_tc = max(128, vmem_budget // ((4 * tb + 2) * bytes_per_el))
    if n_cols <= max_tc:
        return tb, n_cols                # one wide, lane-dense block per row tile
    for cand in (131072, 65536, 32768, 16384, 8192, 4096,
                 2048, 1024, 512, 256, 128):
        if cand <= max_tc and n_cols % cand == 0:
            return tb, cand
    return tb, n_cols                    # fallback (odd sizes): full-dim block


# ----------------------------------------------------------------------------
# Pallas kernels
# ----------------------------------------------------------------------------
def _posenc_add_kernel(x_ref, pe_ref, o_ref):
    # x_ref / o_ref: (TB, TC); pe_ref: (1, TC) -> sublane-broadcast add.
    o_ref[...] = x_ref[...] + pe_ref[...]


def _posenc_add_dropout_kernel(seed_ref, x_ref, pe_ref, o_ref, *, p: float):
    # Training-mode dropout: keep w.p. (1-p), scale kept values by 1/(1-p).
    # Stateless counter-based hash of the global element index: mask is
    # independent of tiling and needs no TPU PRNG state (runs in interpret
    # mode too).
    # TODO(synk): mask is a deterministic hash, not bitwise-identical to
    # torch.nn.Dropout's RNG stream (same distribution/semantics).
    tb, tc = x_ref.shape
    y = x_ref[...] + pe_ref[...]

    c = pl.program_id(0)                       # column-tile index (outer axis)
    r = pl.program_id(1)                       # batch-tile index (inner axis)
    n_cols = pl.num_programs(0) * tc           # total flattened columns = S*D

    rows = jax.lax.broadcasted_iota(jnp.int32, (tb, tc), 0)
    cols = jax.lax.broadcasted_iota(jnp.int32, (tb, tc), 1)
    idx_i32 = (r * tb + rows) * n_cols + (c * tc + cols)   # global element index
    idx = idx_i32.astype(jnp.uint32)

    seed = seed_ref[0].astype(jnp.uint32)
    state = idx + seed * jnp.uint32(0x9E3779B9)
    # splitmix32-style avalanche (logical shifts on uint32)
    state = (state ^ (state >> 16)) * jnp.uint32(0x7FEB352D)
    state = (state ^ (state >> 15)) * jnp.uint32(0x846CA68B)
    bits = state ^ (state >> 16)

    # Drop iff bits < p * 2^32: pure unsigned integer compare (no f32 convert).
    threshold = jnp.uint32(min(int(p * 4294967296.0), 4294967295))
    keep = bits >= threshold
    scale = jnp.float32(1.0 / (1.0 - p))
    o_ref[...] = jnp.where(keep, y * scale, jnp.zeros_like(y)).astype(o_ref.dtype)


# ----------------------------------------------------------------------------
# Wrapper
# ----------------------------------------------------------------------------
def positional_encoding_forward(x, pe, *, dropout_p: float = 0.0,
                                training: bool = False, seed: int = 0):
    """x: (B, S, D); pe: (max_len, D).  Returns dropout(x + pe[:S])."""
    B, S, D = x.shape
    n = S * D
    dtype = x.dtype

    if training and dropout_p >= 1.0:
        return jnp.zeros_like(x)        # degenerate p==1 case (1/(1-p) undefined)

    # Flatten: x[b, s, d] + pe[s, d] == x2[b, s*D+d] + pe_row[0, s*D+d].
    # Contiguous reshapes -> no data movement.
    x2 = x.reshape(B, n)
    pe_row = pe[:S].astype(dtype).reshape(1, n)

    tb, tc = _pick_tiles(B, n, bytes_per_el=dtype.itemsize)
    grid = (n // tc, B // tb)           # column axis OUTER -> pe block stays resident

    x_spec = pl.BlockSpec((tb, tc), lambda c, r, *_: (r, c))
    pe_spec = pl.BlockSpec((1, tc), lambda c, r, *_: (0, c))
    o_spec = pl.BlockSpec((tb, tc), lambda c, r, *_: (r, c))
    out_shape = jax.ShapeDtypeStruct((B, n), dtype)
    cparams = pltpu.CompilerParams(
        dimension_semantics=("parallel", "parallel"),
        vmem_limit_bytes=32 * 1024 * 1024,
    )

    if training and dropout_p > 0.0:
        kernel = functools.partial(_posenc_add_dropout_kernel, p=float(dropout_p))
        seed_arr = jnp.asarray([seed], dtype=jnp.int32)
        out2 = pl.pallas_call(
            kernel,
            out_shape=out_shape,
            grid_spec=pltpu.PrefetchScalarGridSpec(
                num_scalar_prefetch=1,        # seed -> SMEM via scalar prefetch
                grid=grid,
                in_specs=[x_spec, pe_spec],
                out_specs=o_spec,
            ),
            compiler_params=cparams,
        )(seed_arr, x2, pe_row)
    else:
        # eval mode: dropout is identity
        out2 = pl.pallas_call(
            _posenc_add_kernel,
            out_shape=out_shape,
            grid_spec=pltpu.PrefetchScalarGridSpec(
                num_scalar_prefetch=0,
                grid=grid,
                in_specs=[x_spec, pe_spec],
                out_specs=o_spec,
            ),
            compiler_params=cparams,
        )(x2, pe_row)

    return out2.reshape(B, S, D)


# ----------------------------------------------------------------------------
# Demo / self-test
# ----------------------------------------------------------------------------
if __name__ == "__main__":
    d_model = 32
    max_len = 16
    dropout_p = 0.1
    B, S = 2, 8

    key = jax.random.PRNGKey(0)
    x = jax.random.normal(key, (B, S, d_model), dtype=jnp.float32)
    pe = make_positional_encoding(d_model, max_len)

    # Eval-mode forward (dropout = identity), matching module.eval() semantics.
    out = positional_encoding_forward(x, pe, dropout_p=dropout_p, training=False)
    out = jax.block_until_ready(out)
    ref = x + pe[:S][None, :, :]
    assert out.shape == (B, S, d_model)
    assert jnp.allclose(out, ref, atol=1e-6), "eval-mode mismatch vs reference"

    # Training-mode forward: in-kernel stateless-hash dropout.
    out_train = positional_encoding_forward(
        x, pe, dropout_p=dropout_p, training=True, seed=1234)
    out_train = jax.block_until_ready(out_train)
    assert out_train.shape == (B, S, d_model)
    scaled = ref / (1.0 - dropout_p)
    ok = jnp.logical_or(out_train == 0.0,
                        jnp.isclose(out_train, scaled, atol=1e-5, rtol=1e-5))
    assert bool(jnp.all(ok)), "training-mode values are not in {0, (x+pe)/(1-p)}"

    print("KERNEL_OK")
</pallas_src>

<mosaic_0001>
module attributes {stable_mosaic.version = 11 : i64} {
  func.func @_posenc_add_kernel(%arg0: i32, %arg1: i32, %arg2: memref<2x256xf32, #tpu.memory_space<vmem>>, %arg3: memref<1x256xf32, #tpu.memory_space<vmem>>, %arg4: memref<2x256xf32, #tpu.memory_space<vmem>>) attributes {dimension_semantics = [#tpu.dimension_semantics<parallel>, #tpu.dimension_semantics<parallel>], iteration_bounds = array<i64: 1, 1>, scalar_prefetch = 0 : i64, scratch_operands = 0 : i64, tpu.core_type = #tpu.core_type<tc>, window_params = [{transform_indices = @transform_0, window_bounds = array<i64: 2, 256>}, {transform_indices = @transform_1, window_bounds = array<i64: 1, 256>}, {transform_indices = @transform_2, window_bounds = array<i64: 2, 256>}]} {
    %c0 = arith.constant 0 : index
    %c0_0 = arith.constant 0 : index
    %0 = vector.load %arg2[%c0, %c0_0] : memref<2x256xf32, #tpu.memory_space<vmem>>, vector<2x256xf32>
    %c0_1 = arith.constant 0 : index
    %c0_2 = arith.constant 0 : index
    %1 = vector.load %arg3[%c0_1, %c0_2] : memref<1x256xf32, #tpu.memory_space<vmem>>, vector<1x256xf32>
    %2 = vector.broadcast %1 : vector<1x256xf32> to vector<2x256xf32>
    %3 = arith.addf %0, %2 : vector<2x256xf32>
    %c0_3 = arith.constant 0 : index
    %c0_4 = arith.constant 0 : index
    %4 = vector.load %arg4[%c0_3, %c0_4] : memref<2x256xf32, #tpu.memory_space<vmem>>, vector<2x256xf32>
    tpu.vector_store %arg4[%c0_3, %c0_4], %3 {strides = array<i32>} : memref<2x256xf32, #tpu.memory_space<vmem>>, vector<2x256xf32>,
    return
  }
  func.func @transform_0(%arg0: i32, %arg1: i32) -> (i32, i32) {
    %c0_i32 = arith.constant 0 : i32
    return %arg1, %arg0 : i32, i32
  }
  func.func @transform_1(%arg0: i32, %arg1: i32) -> (i32, i32) {
    %c0_i32 = arith.constant 0 : i32
    %c0_i32_0 = arith.constant 0 : i32
    return %c0_i32, %arg0 : i32, i32
  }
  func.func @transform_2(%arg0: i32, %arg1: i32) -> (i32, i32) {
    %c0_i32 = arith.constant 0 : i32
    return %arg1, %arg0 : i32, i32
  }
}

</mosaic_0001>

<llo_original>
// kernel: tpu_custom_call.1
$region0: #{tpu_custom_call.1}
  #allocation0 [shape = 'u32[]', space=smem, size = 0x4, offset = 0x4, fixed_abs, tag = 'smem constant byte address 0x4 - core index']
  #allocation1 [shape = 'u32[72,128]{1,0:T(1,128)}', space=vmem, size = 0x9000, scoped, tag = 'internal scratch']
  %s0 = inlined_call_operand.hbm [shape: f32[2,256], index: 0, kind: input, shape index: {}]
  %s1 = inlined_call_operand.hbm [shape: f32[1,256], index: 1, kind: input, shape index: {}]
  %s2 = inlined_call_operand.hbm [shape: f32[2,256], index: 2, kind: output, shape index: {}]
  %s3 = sld [smem:[#allocation0]]
  $region26: #{tpu_custom_call.1} parent=0
    _
  %s5 = ssub.s32 1, %s3
  %s6 = scalar_select 0, %s5, %s3
  $region1: #{tpu_custom_call.1} parent=0
    #allocation2 [shape = 'u8[2048]{0}', space=vmem, size = 0x800, scoped, tag = 'input window, operand 0, single buffered']
    #allocation3 [shape = 's32[1]{0}', space=sflag, size = 0x4, scoped, tag = 'scoped memory for tpu_custom_call.1']
    #allocation4 [shape = 's32[1]{0}', space=sflag, size = 0x4, scoped, tag = 'scoped memory for tpu_custom_call.1']
    #allocation5 [shape = 'u8[1024]{0}', space=vmem, size = 0x400, scoped, tag = 'input window, operand 1, single buffered']
    #allocation6 [shape = 's32[1]{0}', space=sflag, size = 0x4, scoped, tag = 'scoped memory for tpu_custom_call.1']
    #allocation7 [shape = 'u8[2048]{0}', space=vmem, size = 0x800, scoped, tag = 'output window, operand 0, single buffered']
    %7 = vsyncpa [#allocation3], 0
    %8 = vsyncpa [#allocation6], 0
    %9 = vsyncpa [#allocation4], 0
    // Predicated region
    $region2: #{tpu_custom_call.1} parent=1 // pred_check
      _
    $region3: #{tpu_custom_call.1} parent=1 // pred_check_branch
      %11 = sbr.rel (0) target = $region5
    $region4: #{tpu_custom_call.1} parent=1 // pred_region
      %13 = vsyncadd [#allocation3], 0
      %s15 = sshll.u32 %s0, 4
      %s16 = int_to_ptr.hbm [resolvable:$true] %s15
      %s17 = sshll.u32 [#allocation2], 4
      %s18 = int_to_ptr.vmem [resolvable:$true] %s17
      %20 = dma.hbm_to_vmem [thread:$0]  %s16, 64, %s18, [#allocation3]
    $region5: #{tpu_custom_call.1} parent=1 // pred_fallthru
      _
    // Predicated region
    $region6: #{tpu_custom_call.1} parent=1 // pred_check
      _
    $region7: #{tpu_custom_call.1} parent=1 // pred_check_branch
      %22 = sbr.rel (0) target = $region9
    $region8: #{tpu_custom_call.1} parent=1 // pred_region
      %24 = vsyncadd [#allocation6], 0
      %s26 = sshll.u32 %s1, 4
      %s27 = int_to_ptr.hbm [resolvable:$true] %s26
      %s28 = sshll.u32 [#allocation5], 4
      %s29 = int_to_ptr.vmem [resolvable:$true] %s28
      %31 = dma.hbm_to_vmem [thread:$0]  %s27, 32, %s29, [#allocation6]
    $region9: #{tpu_custom_call.1} parent=1 // pred_fallthru
      _
    // Predicated region
    $region10: #{tpu_custom_call.1} parent=1 // pred_check
      _
    $region11: #{tpu_custom_call.1} parent=1 // pred_check_branch
      %33 = sbr.rel (0) target = $region13
    $region12: #{tpu_custom_call.1} parent=1 // pred_region
      %35 = dma.done [#allocation3], 64
    $region13: #{tpu_custom_call.1} parent=1 // pred_fallthru
      _
    // Predicated region
    $region14: #{tpu_custom_call.1} parent=1 // pred_check
      _
    $region15: #{tpu_custom_call.1} parent=1 // pred_check_branch
      %37 = sbr.rel (0) target = $region17
    $region16: #{tpu_custom_call.1} parent=1 // pred_region
      %39 = dma.done [#allocation6], 32
    $region17: #{tpu_custom_call.1} parent=1 // pred_fallthru
      _
    %v40 = vld [vmem:[#allocation2] sm:$0xf]
    %v41 = vld [vmem:[#allocation5] sm:$0x3]
    %v43 = vperm.slane %v41, 0
    %v44 = vperm.slane %v41, 1
    %v45 = vrot.slane %v44, 6
    %vm46 = vcmask 1041408
    %v47 = vsel %vm46, %v43, %v45
    %v49 = vadd.f32 %v40, %v47
    %50 = vst [vmem:[#allocation7] sm:$0xf] %v49
    // Predicated region
    $region18: #{tpu_custom_call.1} parent=1 // pred_check
      _
    $region19: #{tpu_custom_call.1} parent=1 // pred_check_branch
      %52 = sbr.rel (0) target = $region21
    $region20: #{tpu_custom_call.1} parent=1 // pred_region
      %54 = vsyncadd [#allocation4], 0
      %s56 = sshll.u32 [#allocation7], 4
      %s57 = int_to_ptr.vmem [resolvable:$true] %s56
      %s58 = sshll.u32 %s2, 4
      %s59 = int_to_ptr.hbm [resolvable:$true] %s58
      %61 = dma.vmem_to_hbm [thread:$0]  %s57, 64, %s59, [#allocation4]
    $region21: #{tpu_custom_call.1} parent=1 // pred_fallthru
      _
    // Predicated region
    $region22: #{tpu_custom_call.1} parent=1 // pred_check
      _
    $region23: #{tpu_custom_call.1} parent=1 // pred_check_branch
      %63 = sbr.rel (0) target = $region25
    $region24: #{tpu_custom_call.1} parent=1 // pred_region
      %65 = dma.done [#allocation4], 64
    $region25: #{tpu_custom_call.1} parent=1 // pred_fallthru
      _
    %66 = vsyncpa [#allocation3], 1
    %67 = vsyncpa [#allocation6], 1
    %68 = vsyncpa [#allocation4], 1

</llo_original>
